<compile_context>
chip_gen: v7x
topology: tpu7x:2x2x1
jax: 0.10.0
libtpu: 0.0.40
codegen_flags: <defaults>
</compile_context>

<pallas_src>
import functools

import jax
import jax.numpy as jnp
from jax.experimental import pallas as pl
from jax.experimental.pallas import tpu as pltpu


def _cdiv(a, b):
    return (a + b - 1) // b


def _round_up(a, b):
    return _cdiv(a, b) * b


def _ce_label_smooth_kernel(logits_ref, labels_ref, out_ref, acc_ref, *,
                            num_classes: int, epsilon: float,
                            n_valid: int, scale: float):
    # logits_ref: (TILE_N, C)   | labels_ref: (TILE_N, 1) int32
    # out_ref:    (8, 128) f32  | acc_ref:    (TILE_N, 1) f32 scratch
    i = pl.program_id(0)
    n_tiles = pl.num_programs(0)

    @pl.when(i == 0)
    def _():
        acc_ref[...] = jnp.zeros_like(acc_ref)

    x = logits_ref[...].astype(jnp.float32)              # upcast in-vreg
    tn, c = x.shape

    # Stable log-softmax statistics (log_probs never materialized).
    m = jnp.max(x, axis=1, keepdims=True)                            # (TN,1)
    z = x - m
    lse = jnp.log(jnp.sum(jnp.exp(z), axis=1, keepdims=True))        # (TN,1)

    # Single weighted lane reduction replaces {one-hot gather, uniform sum}:
    #   w = eps/C + (1-eps) * [class == label]
    #   -sum_c t*logp  =  lse - sum_c w*z     (per row)
    class_ids = jax.lax.broadcasted_iota(jnp.int32, (tn, c), 1)
    sel = class_ids == labels_ref[...]
    uniform = epsilon / num_classes
    w = jnp.where(sel, 1.0 - epsilon + uniform, uniform)
    row_contrib = jnp.sum(w * z, axis=1, keepdims=True) - lse        # (TN,1)

    # Mask rows that are batch padding (global row index >= true N).
    row_ids = i * tn + jax.lax.broadcasted_iota(jnp.int32, (tn, 1), 0)
    row_contrib = jnp.where(row_ids < n_valid, row_contrib, 0.0)

    # Element-wise accumulation; no per-tile cross-sublane reduce.
    acc_ref[...] += row_contrib

    @pl.when(i == n_tiles - 1)
    def _():
        # One sublane reduce at the very end; scale = -1/N folds sign + mean.
        total = jnp.sum(acc_ref[...], axis=0, keepdims=True) * scale  # (1,1)
        out_ref[...] = jnp.broadcast_to(total, out_ref.shape)


def cross_entropy_label_smooth(logits, targets, *, num_classes, epsilon=0.1,
                               tile_rows=None):
    """logits: (N, C) float (any dtype), targets: (N,) int -> scalar f32."""
    n, c = logits.shape
    assert c == num_classes

    itemsize = jnp.dtype(logits.dtype).itemsize
    # Sublane packing: 8 rows/vreg for 32-bit, 16 for bf16, 32 for int8/fp8.
    sub = max(8, 32 // max(itemsize, 1))

    if tile_rows is None:
        # ~12 MiB per logits block (double-buffered ~24 MiB < 32 MiB limit),
        # capped at a few thousand rows, never larger than the padded batch.
        rows_budget = (12 * 1024 * 1024) // max(c * itemsize, 1)
        tile_n = min(max(rows_budget, sub), 4096)
    else:
        tile_n = max(int(tile_rows), sub)
    tile_n = min(tile_n, _round_up(n, sub))
    tile_n = max(sub, (tile_n // sub) * sub)

    n_tiles = _cdiv(n, tile_n)
    n_pad = n_tiles * tile_n

    if n_pad != n:
        logits = jnp.pad(logits, ((0, n_pad - n), (0, 0)))
        targets = jnp.pad(targets, (0, n_pad - n))
    labels2d = targets.reshape(n_pad, 1).astype(jnp.int32)

    kernel = functools.partial(
        _ce_label_smooth_kernel,
        num_classes=num_classes, epsilon=float(epsilon),
        n_valid=n, scale=-1.0 / n)

    out = pl.pallas_call(
        kernel,
        out_shape=jax.ShapeDtypeStruct((8, 128), jnp.float32),
        grid_spec=pltpu.PrefetchScalarGridSpec(
            num_scalar_prefetch=0,
            grid=(n_tiles,),
            in_specs=[
                pl.BlockSpec((tile_n, c), lambda i: (i, 0)),
                pl.BlockSpec((tile_n, 1), lambda i: (i, 0)),
            ],
            out_specs=pl.BlockSpec((8, 128), lambda i: (0, 0)),
            scratch_shapes=[pltpu.VMEM((tile_n, 1), jnp.float32)],
        ),
        compiler_params=pltpu.CompilerParams(
            dimension_semantics=("arbitrary",),
            vmem_limit_bytes=32 * 1024 * 1024,
        ),
        cost_estimate=pl.CostEstimate(
            flops=6 * n_pad * c,
            transcendentals=n_pad * c,
            bytes_accessed=n_pad * c * itemsize + n_pad * 4 + 8 * 128 * 4,
        ),
    )(logits, labels2d)

    return out[0, 0]


def _reference(logits, targets, num_classes, epsilon=0.1):
    logits = logits.astype(jnp.float32)
    log_probs = jax.nn.log_softmax(logits, axis=1)
    onehot = jax.nn.one_hot(targets, num_classes, dtype=jnp.float32)
    t = (1.0 - epsilon) * onehot + epsilon / num_classes
    return (-t * log_probs).mean(0).sum()


if __name__ == "__main__":
    key = jax.random.PRNGKey(0)
    k1, k2, k3, k4, k5, k6 = jax.random.split(key, 6)
    eps = 0.1

    # Primary small-shape test (module's typical use): N=8, C=16, f32.
    num_classes, batch = 16, 8
    logits = jax.random.normal(k1, (batch, num_classes), dtype=jnp.float32)
    targets = jax.random.randint(k2, (batch,), 0, num_classes, dtype=jnp.int32)
    loss = jax.block_until_ready(cross_entropy_label_smooth(
        logits, targets, num_classes=num_classes, epsilon=eps))
    ref = _reference(logits, targets, num_classes, eps)
    assert jnp.allclose(loss, ref, atol=1e-5, rtol=1e-5), (loss, ref)

    # Multi-tile accumulator + padded-row masking (N not divisible by tile).
    n2, c2 = 40, 16
    lg2 = jax.random.normal(k3, (n2, c2), dtype=jnp.float32)
    tg2 = jax.random.randint(k4, (n2,), 0, c2, dtype=jnp.int32)
    loss2 = jax.block_until_ready(cross_entropy_label_smooth(
        lg2, tg2, num_classes=c2, epsilon=eps, tile_rows=16))
    ref2 = _reference(lg2, tg2, c2, eps)
    assert jnp.allclose(loss2, ref2, atol=1e-5, rtol=1e-5), (loss2, ref2)

    # bf16 in-HBM / f32 in-vreg upcast path, lane-multiple class count.
    n3, c3 = 24, 384
    lg3 = jax.random.normal(k5, (n3, c3), dtype=jnp.bfloat16)
    tg3 = jax.random.randint(k6, (n3,), 0, c3, dtype=jnp.int32)
    loss3 = jax.block_until_ready(cross_entropy_label_smooth(
        lg3, tg3, num_classes=c3, epsilon=eps))
    ref3 = _reference(lg3, tg3, c3, eps)
    assert jnp.allclose(loss3, ref3, atol=1e-4, rtol=1e-4), (loss3, ref3)

    print("KERNEL_OK")
</pallas_src>

<mosaic_0001>
module attributes {stable_mosaic.version = 11 : i64} {
  func.func @_ce_label_smooth_kernel(%arg0: i32, %arg1: memref<8x16xf32, #tpu.memory_space<vmem>>, %arg2: memref<8x1xi32, #tpu.memory_space<vmem>>, %arg3: memref<8x128xf32, #tpu.memory_space<vmem>>, %arg4: memref<8x1xf32, #tpu.memory_space<vmem>>) attributes {dimension_semantics = [#tpu.dimension_semantics<arbitrary>], iteration_bounds = array<i64: 1>, scalar_prefetch = 0 : i64, scratch_operands = 1 : i64, tpu.core_type = #tpu.core_type<tc>, window_params = [{transform_indices = @transform_0, window_bounds = array<i64: 8, 16>}, {transform_indices = @transform_1, window_bounds = array<i64: 8, 1>}, {pipeline_mode = #tpu.pipeline_mode<synchronous>, transform_indices = @transform_2, window_bounds = array<i64: 8, 128>}]} {
    %c0_i32 = arith.constant 0 : i32
    %0 = arith.cmpi eq, %arg0, %c0_i32 : i32
    %1 = arith.extui %0 : i1 to i32
    %c0_i32_0 = arith.constant 0 : i32
    %2 = arith.cmpi ne, %1, %c0_i32_0 : i32
    scf.if %2 {
      %cst_16 = arith.constant 0.000000e+00 : f32
      %37 = vector.broadcast %cst_16 : f32 to vector<8x1xf32>
      %c0_17 = arith.constant 0 : index
      %c0_18 = arith.constant 0 : index
      %38 = vector.load %arg4[%c0_17, %c0_18] : memref<8x1xf32, #tpu.memory_space<vmem>>, vector<8x1xf32>
      tpu.vector_store %arg4[%c0_17, %c0_18], %37 {strides = array<i32>} : memref<8x1xf32, #tpu.memory_space<vmem>>, vector<8x1xf32>,
    } else {
    }
    %c0 = arith.constant 0 : index
    %c0_1 = arith.constant 0 : index
    %3 = vector.load %arg1[%c0, %c0_1] : memref<8x16xf32, #tpu.memory_space<vmem>>, vector<8x16xf32>
    %cst = arith.constant dense<0xFF800000> : vector<8xf32>
    %4 = vector.multi_reduction <maximumf>, %3, %cst [1] : vector<8x16xf32> to vector<8xf32>
    %5 = vector.shape_cast %4 : vector<8xf32> to vector<8x1xf32>
    %6 = vector.broadcast %5 : vector<8x1xf32> to vector<8x16xf32>
    %7 = arith.subf %3, %6 : vector<8x16xf32>
    %8 = math.exp %7 : vector<8x16xf32>
    %cst_2 = arith.constant dense<0.000000e+00> : vector<8xf32>
    %9 = vector.multi_reduction <add>, %8, %cst_2 [1] : vector<8x16xf32> to vector<8xf32>
    %10 = vector.shape_cast %9 : vector<8xf32> to vector<8x1xf32>
    %11 = math.log %10 : vector<8x1xf32>
    %12 = tpu.iota {dimensions = array<i32: 1>} : vector<8x16xi32>
    %c0_3 = arith.constant 0 : index
    %c0_4 = arith.constant 0 : index
    %13 = vector.load %arg2[%c0_3, %c0_4] : memref<8x1xi32, #tpu.memory_space<vmem>>, vector<8x1xi32>
    %14 = vector.broadcast %13 : vector<8x1xi32> to vector<8x16xi32>
    %15 = arith.cmpi eq, %12, %14 : vector<8x16xi32>
    %cst_5 = arith.constant 9.062500e-01 : f32
    %cst_6 = arith.constant 6.250000e-03 : f32
    %16 = vector.broadcast %cst_5 : f32 to vector<8x16xf32>
    %17 = vector.broadcast %cst_6 : f32 to vector<8x16xf32>
    %18 = arith.select %15, %16, %17 : vector<8x16xi1>, vector<8x16xf32>
    %19 = arith.mulf %18, %7 : vector<8x16xf32>
    %cst_7 = arith.constant dense<0.000000e+00> : vector<8xf32>
    %20 = vector.multi_reduction <add>, %19, %cst_7 [1] : vector<8x16xf32> to vector<8xf32>
    %21 = vector.shape_cast %20 : vector<8xf32> to vector<8x1xf32>
    %22 = arith.subf %21, %11 : vector<8x1xf32>
    %c8_i32 = arith.constant 8 : i32
    %23 = arith.muli %arg0, %c8_i32 : i32
    %24 = tpu.iota {dimensions = array<i32: 0>} : vector<8x1xi32>
    %25 = vector.broadcast %23 : i32 to vector<8x1xi32>
    %26 = arith.addi %25, %24 : vector<8x1xi32>
    %c8_i32_8 = arith.constant 8 : i32
    %27 = vector.broadcast %c8_i32_8 : i32 to vector<8x1xi32>
    %28 = arith.cmpi slt, %26, %27 : vector<8x1xi32>
    %cst_9 = arith.constant 0.000000e+00 : f32
    %29 = vector.broadcast %cst_9 : f32 to vector<8x1xf32>
    %30 = arith.select %28, %22, %29 : vector<8x1xi1>, vector<8x1xf32>
    %c0_10 = arith.constant 0 : index
    %c0_11 = arith.constant 0 : index
    %31 = vector.load %arg4[%c0_10, %c0_11] : memref<8x1xf32, #tpu.memory_space<vmem>>, vector<8x1xf32>
    %32 = arith.addf %31, %30 : vector<8x1xf32>
    %c0_12 = arith.constant 0 : index
    %c0_13 = arith.constant 0 : index
    %33 = vector.load %arg4[%c0_12, %c0_13] : memref<8x1xf32, #tpu.memory_space<vmem>>, vector<8x1xf32>
    tpu.vector_store %arg4[%c0_12, %c0_13], %32 {strides = array<i32>} : memref<8x1xf32, #tpu.memory_space<vmem>>, vector<8x1xf32>,
    %c0_i32_14 = arith.constant 0 : i32
    %34 = arith.cmpi eq, %arg0, %c0_i32_14 : i32
    %35 = arith.extui %34 : i1 to i32
    %c0_i32_15 = arith.constant 0 : i32
    %36 = arith.cmpi ne, %35, %c0_i32_15 : i32
    scf.if %36 {
      %c0_16 = arith.constant 0 : index
      %c0_17 = arith.constant 0 : index
      %37 = vector.load %arg4[%c0_16, %c0_17] : memref<8x1xf32, #tpu.memory_space<vmem>>, vector<8x1xf32>
      %cst_18 = arith.constant dense<0.000000e+00> : vector<1xf32>
      %38 = vector.multi_reduction <add>, %37, %cst_18 [0] : vector<8x1xf32> to vector<1xf32>
      %39 = vector.shape_cast %38 : vector<1xf32> to vector<1x1xf32>
      %cst_19 = arith.constant -1.250000e-01 : f32
      %40 = vector.broadcast %cst_19 : f32 to vector<1x1xf32>
      %41 = arith.mulf %39, %40 : vector<1x1xf32>
      %42 = vector.shape_cast %41 : vector<1x1xf32> to vector<1x1xf32>
      %43 = vector.broadcast %42 : vector<1x1xf32> to vector<8x128xf32>
      %c0_20 = arith.constant 0 : index
      %c0_21 = arith.constant 0 : index
      %44 = vector.load %arg3[%c0_20, %c0_21] : memref<8x128xf32, #tpu.memory_space<vmem>>, vector<8x128xf32>
      tpu.vector_store %arg3[%c0_20, %c0_21], %43 {strides = array<i32>} : memref<8x128xf32, #tpu.memory_space<vmem>>, vector<8x128xf32>,
    } else {
    }
    return
  }
  func.func @transform_0(%arg0: i32) -> (i32, i32) {
    %c0_i32 = arith.constant 0 : i32
    %c0_i32_0 = arith.constant 0 : i32
    return %arg0, %c0_i32 : i32, i32
  }
  func.func @transform_1(%arg0: i32) -> (i32, i32) {
    %c0_i32 = arith.constant 0 : i32
    %c0_i32_0 = arith.constant 0 : i32
    return %arg0, %c0_i32 : i32, i32
  }
  func.func @transform_2(%arg0: i32) -> (i32, i32) {
    %c0_i32 = arith.constant 0 : i32
    %c0_i32_0 = arith.constant 0 : i32
    %c0_i32_1 = arith.constant 0 : i32
    return %c0_i32, %c0_i32_0 : i32, i32
  }
}

</mosaic_0001>

<llo_original>
// kernel: tpu_custom_call.1
$region0: #{tpu_custom_call.1}
  #allocation0 [shape = 'u32[]', space=smem, size = 0x4, offset = 0x4, fixed_abs, tag = 'smem constant byte address 0x4 - core index']
  #allocation1 [shape = 'u32[144,128]{1,0:T(1,128)}', space=vmem, size = 0x12000, scoped, tag = 'internal scratch']
  #allocation2 [shape = 'f32[8,1]{1,0:T(8,128)}', space=vmem, size = 0x1000, scoped, tag = 'scratch operand']
  %s0 = inlined_call_operand.vmem [shape: f32[8,16], index: 0, kind: input, shape index: {}]
  %s1 = inlined_call_operand.vmem [shape: s32[8,1], index: 1, kind: input, shape index: {}]
  %s2 = inlined_call_operand.hbm [shape: f32[8,128], index: 2, kind: output, shape index: {}]
  %s3 = sld [smem:[#allocation0]]
  $region26: #{tpu_custom_call.1} parent=0
    _
  %s5 = ssub.s32 1, %s3
  %s6 = scalar_select 0, %s5, %s3
  $region1: #{tpu_custom_call.1} parent=0
    #allocation3 [shape = 'u8[4096]{0}', space=vmem, size = 0x1000, scoped, tag = 'output window, operand 0, single buffered']
    #allocation4 [shape = 's32[1]{0}', space=sflag, size = 0x4, scoped, tag = 'scoped memory for tpu_custom_call.1']
    %7 = vsyncpa [#allocation4], 0
    // Predicated region
    $region2: #{tpu_custom_call.1} parent=1 // pred_check
      _
    $region3: #{tpu_custom_call.1} parent=1 // pred_check_branch
      %9 = sbr.rel (0) target = $region5
    $region4: #{tpu_custom_call.1} parent=1 // pred_region
      _
    $region5: #{tpu_custom_call.1} parent=1 // pred_fallthru
      _
    // Predicated region
    $region6: #{tpu_custom_call.1} parent=1 // pred_check
      _
    $region7: #{tpu_custom_call.1} parent=1 // pred_check_branch
      %11 = sbr.rel (0) target = $region9
    $region8: #{tpu_custom_call.1} parent=1 // pred_region
      _
    $region9: #{tpu_custom_call.1} parent=1 // pred_fallthru
      _
    %p12 = scmp.eq.s32.totalorder 0, 0
    // Predicated region
    $region10: #{tpu_custom_call.1} parent=1 // pred_check
      %p13 = pneg %p12
    $region11: #{tpu_custom_call.1} parent=1 // pred_check_branch
      %15 = sbr.rel (%p13) target = $region13
    $region12: #{tpu_custom_call.1} parent=1 // pred_region
      %vm16 = vcmask 7168
      %17 = vst.msk [vmem:[#allocation2] sm:$0xff] %vm16, 0.0
    $region13: #{tpu_custom_call.1} parent=1 // pred_fallthru
      _
    %v18 = vld [vmem:[%s0] sm:$0xff]
    %vm19 = vcmask 130048
    %v20 = vsel %vm19, %v18, -inf
    %21 = vmax.xlane.f32.xlu0 %v20
    %v22 = vpop.xlane.xlu0 %21
    %v23 = vsub.f32 %v18, %v22
    %v24 = vmul.f32 %v23, 1.442695
    %v25 = vpow.pop %v24
    %v26 = vsel %vm19, %v25, 0.0
    %27 = vadd.xlane.f32.xlu0 %v26
    %v28 = vpop.xlane.xlu0 %27
    %v29 = vlog2.pop %v28
    %v30 = vmul.f32 %v29, 0.6931472
    %v31 = vlaneseq
    %v32 = vand.u32 %v31, 127
    %v33 = vld [vmem:[%s1] sm:$0xff]
    %34 = vset.pattern.permute.xlu0 0
    %35 = vperm.xlu0 %34, %v33
    %v36 = vpop.permute.xlu0 %35
    %vm37 = vcmp.eq.s32.totalorder %v32, %v36
    %v38 = vsel %vm37, 0.90625, 0.00625
    %v39 = vmul.f32 %v38, %v23
    %v40 = vsel %vm19, %v39, 0.0
    %41 = vadd.xlane.f32.xlu0 %v40
    %v42 = vpop.xlane.xlu0 %41
    %v43 = vsub.f32 %v42, %v30
    %s44 = smul.u32 0, 8
    %v45 = vlaneseq
    %v46 = vshrl.u32 %v45, 7
    %v47 = vstv %s44
    %v48 = vadd.s32 %v47, %v46
    %vm49 = vcmp.lt.s32.totalorder %v48, 8
    %v50 = vsel %vm49, %v43, 0.0
    %v51 = vld [vmem:[#allocation2] sm:$0xff]
    %v52 = vadd.f32 %v51, %v50
    %vm53 = vcmask 7168
    %54 = vst.msk [vmem:[#allocation2] sm:$0xff] %vm53, %v52
    // Predicated region
    $region14: #{tpu_custom_call.1} parent=1 // pred_check
      %p55 = pneg %p12
    $region15: #{tpu_custom_call.1} parent=1 // pred_check_branch
      %57 = sbr.rel (%p55) target = $region17
    $region16: #{tpu_custom_call.1} parent=1 // pred_region
      %v58 = vld [vmem:[#allocation2] sm:$0xff]
      %v59 = vsel %vm53, %v58, 0.0
      %v60 = vrot.slane %v59, 4
      %v61 = vadd.f32 %v59, %v60
      %v62 = vrot.slane %v61, 2
      %v63 = vadd.f32 %v61, %v62
      %v64 = vrot.slane %v63, 1
      %v65 = vadd.f32 %v63, %v64
      %v66 = vmul.f32 %v65, -0.125
      %68 = vset.pattern.permute.xlu0 0
      %69 = vperm.xlu0 %68, %v66
      %v70 = vpop.permute.xlu0 %69
      %72 = vst [vmem:[#allocation3] sm:$0xff] %v70
    $region17: #{tpu_custom_call.1} parent=1 // pred_fallthru
      _
    // Predicated region
    $region18: #{tpu_custom_call.1} parent=1 // pred_check
      _
    $region19: #{tpu_custom_call.1} parent=1 // pred_check_branch
      %74 = sbr.rel (0) target = $region21
    $region20: #{tpu_custom_call.1} parent=1 // pred_region
      %s76 = ssub.s32 128, 128
      %77 = vsyncadd [#allocation4], %s76
      %s79 = sshll.u32 [#allocation3], 4
      %s80 = int_to_ptr.vmem [resolvable:$true] %s79
      %82 = dma.vmem_to_hbm [thread:$0]  %s80, 128, %s2, [#allocation4]
    $region21: #{tpu_custom_call.1} parent=1 // pred_fallthru
      _
    // Predicated region
    $region22: #{tpu_custom_call.1} parent=1 // pred_check
      _
    $region23: #{tpu_custom_call.1} parent=1 // pred_check_branch
      %84 = sbr.rel (0) target = $region25
    $region24: #{tpu_custom_call.1} parent=1 // pred_region
      %85 = dma.done [#allocation4], 128
    $region25: #{tpu_custom_call.1} parent=1 // pred_fallthru
      _
    %86 = vsyncpa [#allocation4], 1

</llo_original>
